<compile_context>
chip_gen: v7x
topology: tpu7x:2x2x1
jax: 0.10.0
libtpu: 0.0.40
codegen_flags: <defaults>
</compile_context>

<pallas_src>
import math
import functools

import jax
import jax.numpy as jnp
from jax.experimental import pallas as pl
from jax.experimental.pallas import tpu as pltpu

EPS = 1e-5
_LANE = 128          # lane width used only for VMEM-budget estimation
_ROW_MULT = 16       # row-tile multiple (safe sublane granularity for f32/bf16)
_MAX_TILE_ROWS = 512 # ~512-row tiles already reach ~85% of HBM roofline


def _round_up(n, m):
    return ((n + m - 1) // m) * m


def _cdiv(a, b):
    return (a + b - 1) // b


def _ln_math(x, w, b, out_dtype, inv_d, fast_affine):
    """LayerNorm math for one (tm, D) tile. f32 stats, two-pass variance."""
    xf = x.astype(jnp.float32)
    mean = jnp.sum(xf, axis=-1, keepdims=True) * inv_d
    xc = xf - mean
    var = jnp.sum(xc * xc, axis=-1, keepdims=True) * inv_d
    inv = jax.lax.rsqrt(var + EPS)
    if fast_affine:
        # bf16 second pass (v6e/v7x): packed-vreg VALU, halves ops/element.
        y = (xc * inv).astype(out_dtype)
        y = y * w + b if b is not None else y * w
        return y
    y = xc * inv * w
    if b is not None:
        y = y + b
    return y.astype(out_dtype)


def _ln_kernel_bias(x_ref, w_ref, b_ref, o_ref, *, inv_d, fast_affine):
    o_ref[...] = _ln_math(x_ref[...], w_ref[...], b_ref[...],
                          o_ref.dtype, inv_d, fast_affine)


def _ln_kernel_nobias(x_ref, w_ref, o_ref, *, inv_d, fast_affine):
    o_ref[...] = _ln_math(x_ref[...], w_ref[...], None,
                          o_ref.dtype, inv_d, fast_affine)


def _tpu_config():
    """Return (tile_vmem_budget, vmem_limit_bytes, is_v5e)."""
    try:
        vmem_cap = int(pltpu.get_tpu_info().vmem_capacity_bytes)
    except Exception:
        vmem_cap = 64 * 1024 * 1024  # conservative fallback, safe everywhere
    try:
        is_v5e = "v5" in jax.devices()[0].device_kind.lower()
    except Exception:
        is_v5e = False
    if vmem_cap <= 64 * 1024 * 1024:                       # v7x: 64 MiB / TC
        return 14 * 1024 * 1024, 32 * 1024 * 1024, is_v5e
    return 32 * 1024 * 1024, 48 * 1024 * 1024, is_v5e      # v5e / v6e: 128 MiB


def layer_norm(x, weight, bias=None):
    """LayerNorm over the last axis of x. weight/bias have shape (D,)."""
    orig_shape = x.shape
    D = orig_shape[-1]
    rows = math.prod(orig_shape[:-1]) if len(orig_shape) > 1 else 1
    x2 = x.reshape(rows, D)  # collapsing leading dims: no data movement

    tile_budget, vmem_limit, is_v5e = _tpu_config()

    # Row tile: sized from a VMEM budget, capped at _MAX_TILE_ROWS and so the
    # grid keeps >= ~8 steps when rows allow. No HBM padding in either dim:
    # the hidden dim uses a full-extent block; a ragged row edge is handled by
    # Pallas' masked edge-block stores (garbage edge rows never escape, since
    # the reduction is only over the last axis).
    if rows <= _ROW_MULT:
        tm = rows  # single full-extent block
    else:
        itemsize = jnp.dtype(x.dtype).itemsize
        d_lane = _round_up(D, _LANE)
        # ~2x double-buffered in/out tiles + f32 intermediates per row.
        per_row_bytes = d_lane * (4 * itemsize + 3 * 4)
        tm = (tile_budget // per_row_bytes // _ROW_MULT) * _ROW_MULT
        tm = max(_ROW_MULT, min(tm, _MAX_TILE_ROWS))
        tm = min(tm, max(_ROW_MULT, _round_up(_cdiv(rows, 8), _ROW_MULT)))

    grid = (_cdiv(rows, tm),)

    # bf16 affine second pass only where it pays (v6e/v7x); never on v5e.
    fast_affine = (x.dtype == jnp.bfloat16) and (not is_v5e)
    param_dtype = x.dtype if fast_affine else jnp.float32

    w2 = weight.astype(param_dtype).reshape(1, D)

    x_spec = pl.BlockSpec((tm, D), lambda i: (i, 0))
    vec_spec = pl.BlockSpec((1, D), lambda i: (0, 0))
    out_spec = pl.BlockSpec((tm, D), lambda i: (i, 0))
    # TODO(synk): consider pipeline_mode=pl.Buffered(3) on x_spec for v7x if
    # per-step DMA latency shows up with the smaller tiles.

    inv_d = 1.0 / float(D)
    if bias is not None:
        b2 = bias.astype(param_dtype).reshape(1, D)
        kernel = functools.partial(_ln_kernel_bias, inv_d=inv_d,
                                   fast_affine=fast_affine)
        in_specs = [x_spec, vec_spec, vec_spec]
        args = (x2, w2, b2)
    else:
        kernel = functools.partial(_ln_kernel_nobias, inv_d=inv_d,
                                   fast_affine=fast_affine)
        in_specs = [x_spec, vec_spec]
        args = (x2, w2)

    out = pl.pallas_call(
        kernel,
        out_shape=jax.ShapeDtypeStruct((rows, D), x.dtype),
        grid_spec=pltpu.PrefetchScalarGridSpec(
            num_scalar_prefetch=0,
            grid=grid,
            in_specs=in_specs,
            out_specs=out_spec,
        ),
        compiler_params=pltpu.CompilerParams(
            dimension_semantics=("parallel",),
            vmem_limit_bytes=vmem_limit,
        ),
    )(*args)

    return out.reshape(orig_shape)


def _jax_reference(x, weight, bias):
    mean = jnp.mean(x, axis=-1, keepdims=True)
    var = jnp.mean((x - mean) ** 2, axis=-1, keepdims=True)
    y = (x - mean) / jnp.sqrt(var + EPS) * weight
    if bias is not None:
        y = y + bias
    return y


if __name__ == "__main__":
    key = jax.random.PRNGKey(0)
    batch, seq, hidden = 2, 8, 32

    x = jax.random.normal(key, (batch, seq, hidden), dtype=jnp.float32)

    # Parameter init matching the PyTorch module's __init__:
    # weight = ones(ndim); bias = zeros(ndim) when bias=True.
    weight = jnp.ones((hidden,), dtype=jnp.float32)
    bias = jnp.zeros((hidden,), dtype=jnp.float32)

    y = layer_norm(x, weight, bias)       # bias=True path
    y_nb = layer_norm(x, weight, None)    # bias=False path
    jax.block_until_ready((y, y_nb))

    assert jnp.max(jnp.abs(y - _jax_reference(x, weight, bias))) < 1e-4
    assert jnp.max(jnp.abs(y_nb - _jax_reference(x, weight, None))) < 1e-4

    # Ragged row count (rows % tile != 0) to exercise the masked edge block.
    x_r = jax.random.normal(jax.random.PRNGKey(1), (3, 7, hidden),
                            dtype=jnp.float32)
    y_r = layer_norm(x_r, weight, bias)
    jax.block_until_ready(y_r)
    assert jnp.max(jnp.abs(y_r - _jax_reference(x_r, weight, bias))) < 1e-4

    print("KERNEL_OK")
</pallas_src>

<mosaic_0001>
module attributes {stable_mosaic.version = 11 : i64} {
  func.func @_ln_kernel_bias(%arg0: i32, %arg1: memref<16x32xf32, #tpu.memory_space<vmem>>, %arg2: memref<1x32xf32, #tpu.memory_space<vmem>>, %arg3: memref<1x32xf32, #tpu.memory_space<vmem>>, %arg4: memref<16x32xf32, #tpu.memory_space<vmem>>) attributes {dimension_semantics = [#tpu.dimension_semantics<parallel>], iteration_bounds = array<i64: 1>, scalar_prefetch = 0 : i64, scratch_operands = 0 : i64, tpu.core_type = #tpu.core_type<tc>, window_params = [{transform_indices = @transform_0, window_bounds = array<i64: 16, 32>}, {pipeline_mode = #tpu.pipeline_mode<synchronous>, transform_indices = @transform_1, window_bounds = array<i64: 1, 32>}, {pipeline_mode = #tpu.pipeline_mode<synchronous>, transform_indices = @transform_2, window_bounds = array<i64: 1, 32>}, {transform_indices = @transform_3, window_bounds = array<i64: 16, 32>}]} {
    %c0 = arith.constant 0 : index
    %c0_0 = arith.constant 0 : index
    %0 = vector.load %arg1[%c0, %c0_0] : memref<16x32xf32, #tpu.memory_space<vmem>>, vector<16x32xf32>
    %c0_1 = arith.constant 0 : index
    %c0_2 = arith.constant 0 : index
    %1 = vector.load %arg2[%c0_1, %c0_2] : memref<1x32xf32, #tpu.memory_space<vmem>>, vector<1x32xf32>
    %c0_3 = arith.constant 0 : index
    %c0_4 = arith.constant 0 : index
    %2 = vector.load %arg3[%c0_3, %c0_4] : memref<1x32xf32, #tpu.memory_space<vmem>>, vector<1x32xf32>
    %cst = arith.constant dense<0.000000e+00> : vector<16xf32>
    %3 = vector.multi_reduction <add>, %0, %cst [1] : vector<16x32xf32> to vector<16xf32>
    %4 = vector.shape_cast %3 : vector<16xf32> to vector<16x1xf32>
    %cst_5 = arith.constant 3.125000e-02 : f32
    %5 = vector.broadcast %cst_5 : f32 to vector<16x1xf32>
    %6 = arith.mulf %4, %5 : vector<16x1xf32>
    %7 = vector.broadcast %6 : vector<16x1xf32> to vector<16x32xf32>
    %8 = arith.subf %0, %7 : vector<16x32xf32>
    %9 = arith.mulf %8, %8 : vector<16x32xf32>
    %cst_6 = arith.constant dense<0.000000e+00> : vector<16xf32>
    %10 = vector.multi_reduction <add>, %9, %cst_6 [1] : vector<16x32xf32> to vector<16xf32>
    %11 = vector.shape_cast %10 : vector<16xf32> to vector<16x1xf32>
    %cst_7 = arith.constant 3.125000e-02 : f32
    %12 = vector.broadcast %cst_7 : f32 to vector<16x1xf32>
    %13 = arith.mulf %11, %12 : vector<16x1xf32>
    %cst_8 = arith.constant 9.99999974E-6 : f32
    %14 = vector.broadcast %cst_8 : f32 to vector<16x1xf32>
    %15 = arith.addf %13, %14 : vector<16x1xf32>
    %16 = math.rsqrt %15 : vector<16x1xf32>
    %17 = vector.broadcast %16 : vector<16x1xf32> to vector<16x32xf32>
    %18 = arith.mulf %8, %17 : vector<16x32xf32>
    %19 = vector.broadcast %1 : vector<1x32xf32> to vector<16x32xf32>
    %20 = arith.mulf %18, %19 : vector<16x32xf32>
    %21 = vector.broadcast %2 : vector<1x32xf32> to vector<16x32xf32>
    %22 = arith.addf %20, %21 : vector<16x32xf32>
    %c0_9 = arith.constant 0 : index
    %c0_10 = arith.constant 0 : index
    %23 = vector.load %arg4[%c0_9, %c0_10] : memref<16x32xf32, #tpu.memory_space<vmem>>, vector<16x32xf32>
    tpu.vector_store %arg4[%c0_9, %c0_10], %22 {strides = array<i32>} : memref<16x32xf32, #tpu.memory_space<vmem>>, vector<16x32xf32>,
    return
  }
  func.func @transform_0(%arg0: i32) -> (i32, i32) {
    %c0_i32 = arith.constant 0 : i32
    %c0_i32_0 = arith.constant 0 : i32
    return %arg0, %c0_i32 : i32, i32
  }
  func.func @transform_1(%arg0: i32) -> (i32, i32) {
    %c0_i32 = arith.constant 0 : i32
    %c0_i32_0 = arith.constant 0 : i32
    %c0_i32_1 = arith.constant 0 : i32
    return %c0_i32, %c0_i32_0 : i32, i32
  }
  func.func @transform_2(%arg0: i32) -> (i32, i32) {
    %c0_i32 = arith.constant 0 : i32
    %c0_i32_0 = arith.constant 0 : i32
    %c0_i32_1 = arith.constant 0 : i32
    return %c0_i32, %c0_i32_0 : i32, i32
  }
  func.func @transform_3(%arg0: i32) -> (i32, i32) {
    %c0_i32 = arith.constant 0 : i32
    %c0_i32_0 = arith.constant 0 : i32
    return %arg0, %c0_i32 : i32, i32
  }
}

</mosaic_0001>

<llo_original>
// kernel: tpu_custom_call.1
$region0: #{tpu_custom_call.1}
  #allocation0 [shape = 'u32[]', space=smem, size = 0x4, offset = 0x4, fixed_abs, tag = 'smem constant byte address 0x4 - core index']
  #allocation1 [shape = 'u32[144,128]{1,0:T(1,128)}', space=vmem, size = 0x12000, scoped, tag = 'internal scratch']
  %s0 = inlined_call_operand.hbm [shape: f32[16,32], index: 0, kind: input, shape index: {}]
  %s1 = inlined_call_operand.vmem [shape: f32[1,32], index: 1, kind: input, shape index: {}]
  %s2 = inlined_call_operand.vmem [shape: f32[1,32], index: 2, kind: input, shape index: {}]
  %s3 = inlined_call_operand.hbm [shape: f32[16,32], index: 3, kind: output, shape index: {}]
  %s4 = sld [smem:[#allocation0]]
  $region26: #{tpu_custom_call.1} parent=0
    _
  %s6 = ssub.s32 1, %s4
  %s7 = scalar_select 0, %s6, %s4
  $region1: #{tpu_custom_call.1} parent=0
    #allocation2 [shape = 'u8[8192]{0}', space=vmem, size = 0x2000, scoped, tag = 'input window, operand 0, single buffered']
    #allocation3 [shape = 's32[1]{0}', space=sflag, size = 0x4, scoped, tag = 'scoped memory for tpu_custom_call.1']
    #allocation4 [shape = 's32[1]{0}', space=sflag, size = 0x4, scoped, tag = 'scoped memory for tpu_custom_call.1']
    #allocation5 [shape = 'u8[8192]{0}', space=vmem, size = 0x2000, scoped, tag = 'output window, operand 0, single buffered']
    %8 = vsyncpa [#allocation3], 0
    %9 = vsyncpa [#allocation4], 0
    // Predicated region
    $region2: #{tpu_custom_call.1} parent=1 // pred_check
      _
    $region3: #{tpu_custom_call.1} parent=1 // pred_check_branch
      %11 = sbr.rel (0) target = $region5
    $region4: #{tpu_custom_call.1} parent=1 // pred_region
      %s13 = ssub.s32 256, 256
      %14 = vsyncadd [#allocation3], %s13
      %s15 = sshll.u32 [#allocation2], 4
      %s16 = int_to_ptr.vmem [resolvable:$true] %s15
      %21 = dma.hbm_to_vmem [thread:$0]  %s0, 256, %s16, [#allocation3], 128, 128, 8
    $region5: #{tpu_custom_call.1} parent=1 // pred_fallthru
      _
    // Predicated region
    $region6: #{tpu_custom_call.1} parent=1 // pred_check
      _
    $region7: #{tpu_custom_call.1} parent=1 // pred_check_branch
      %23 = sbr.rel (0) target = $region9
    $region8: #{tpu_custom_call.1} parent=1 // pred_region
      _
    $region9: #{tpu_custom_call.1} parent=1 // pred_fallthru
      _
    // Predicated region
    $region10: #{tpu_custom_call.1} parent=1 // pred_check
      _
    $region11: #{tpu_custom_call.1} parent=1 // pred_check_branch
      %25 = sbr.rel (0) target = $region13
    $region12: #{tpu_custom_call.1} parent=1 // pred_region
      _
    $region13: #{tpu_custom_call.1} parent=1 // pred_fallthru
      _
    // Predicated region
    $region14: #{tpu_custom_call.1} parent=1 // pred_check
      _
    $region15: #{tpu_custom_call.1} parent=1 // pred_check_branch
      %27 = sbr.rel (0) target = $region17
    $region16: #{tpu_custom_call.1} parent=1 // pred_region
      %28 = dma.done [#allocation3], 256
    $region17: #{tpu_custom_call.1} parent=1 // pred_fallthru
      _
    %v29 = vld [vmem:[#allocation2] sm:$0xff]
    %v30 = vld [vmem:[#allocation2 + $0x8] sm:$0xff]
    %v31 = vld [vmem:[%s1] sm:$0x1]
    %v32 = vld [vmem:[%s2] sm:$0x1]
    %vm33 = vcmask 261120
    %v34 = vsel %vm33, %v29, 0.0
    %35 = vadd.xlane.f32.xlu0 %v34
    %v36 = vpop.xlane.xlu0 %35
    %v37 = vsel %vm33, %v30, 0.0
    %38 = vadd.xlane.f32.xlu0 %v37
    %v39 = vpop.xlane.xlu0 %38
    %v40 = vmul.f32 %v36, 0.03125
    %v41 = vmul.f32 %v39, 0.03125
    %v42 = vsub.f32 %v29, %v40
    %v43 = vsub.f32 %v30, %v41
    %v44 = vmul.f32 %v42, %v42
    %v45 = vmul.f32 %v43, %v43
    %v46 = vsel %vm33, %v44, 0.0
    %47 = vadd.xlane.f32.xlu0 %v46
    %v48 = vpop.xlane.xlu0 %47
    %v49 = vsel %vm33, %v45, 0.0
    %50 = vadd.xlane.f32.xlu0 %v49
    %v51 = vpop.xlane.xlu0 %50
    %v52 = vmul.f32 %v48, 0.03125
    %v53 = vmul.f32 %v51, 0.03125
    %v54 = vadd.f32 %v52, 1e-05
    %v55 = vadd.f32 %v53, 1e-05
    %v56 = vrsqrt.pop %v54
    %v57 = vrsqrt.pop %v55
    %v58 = vmul.f32 %v42, %v56
    %v59 = vmul.f32 %v43, %v57
    %v61 = vlaneseq
    %v62 = vshrl.u32 %v61, 7
    %v63 = vsub.s32 0, %v62
    %v64 = vrot.slane %v31, %v63
    %v66 = vmul.f32 %v58, %v64
    %v67 = vmul.f32 %v59, %v64
    %v69 = vlaneseq
    %v70 = vshrl.u32 %v69, 7
    %v71 = vsub.s32 0, %v70
    %v72 = vrot.slane %v32, %v71
    %v74 = vadd.f32 %v66, %v72
    %v75 = vadd.f32 %v67, %v72
    %76 = vst.msk [vmem:[#allocation5] sm:$0xff] %vm33, %v74
    %77 = vst.msk [vmem:[#allocation5 + $0x8] sm:$0xff] %vm33, %v75
    // Predicated region
    $region18: #{tpu_custom_call.1} parent=1 // pred_check
      _
    $region19: #{tpu_custom_call.1} parent=1 // pred_check_branch
      %79 = sbr.rel (0) target = $region21
    $region20: #{tpu_custom_call.1} parent=1 // pred_region
      %s81 = ssub.s32 256, 256
      %82 = vsyncadd [#allocation4], %s81
      %s83 = sshll.u32 [#allocation5], 4
      %s84 = int_to_ptr.vmem [resolvable:$true] %s83
      %89 = dma.vmem_to_hbm [thread:$0]  %s84, 256, %s3, [#allocation4], 128, 128, 8
    $region21: #{tpu_custom_call.1} parent=1 // pred_fallthru
      _
    // Predicated region
    $region22: #{tpu_custom_call.1} parent=1 // pred_check
      _
    $region23: #{tpu_custom_call.1} parent=1 // pred_check_branch
      %91 = sbr.rel (0) target = $region25
    $region24: #{tpu_custom_call.1} parent=1 // pred_region
      %92 = dma.done [#allocation4], 256
    $region25: #{tpu_custom_call.1} parent=1 // pred_fallthru
      _
    %93 = vsyncpa [#allocation3], 1
    %94 = vsyncpa [#allocation4], 1

</llo_original>
